<compile_context>
chip_gen: v7x
topology: tpu7x:2x2x1
jax: 0.10.0
libtpu: 0.0.40
codegen_flags: <defaults>
</compile_context>

<pallas_src>
import jax
import jax.numpy as jnp
from jax.experimental import pallas as pl
from jax.experimental.pallas import tpu as pltpu


def _projection_kernel(x_ref, w_ref, b_ref, o_ref):
    # x_ref : (tm, D)   activation tile (compute dtype, e.g. bf16)
    # w_ref : (D, tn)   vocab tile of the transposed weight (compute dtype)
    # b_ref : (1, tn)   vocab tile of the bias (f32, pre-cast in wrapper)
    # o_ref : (tm, tn)  output logits tile
    acc = jnp.dot(x_ref[...], w_ref[...], preferred_element_type=jnp.float32)
    o_ref[...] = (acc + b_ref[...]).astype(o_ref.dtype)


def projection_layer(x, w_t, b, *, tm=256, tn=512, compute_dtype=jnp.bfloat16):
    """y = x @ w_t + b with x: (B, S, D), w_t: (D, V), b: (V,).

    Matches nn.Linear(d_model, vocab_size).forward; f32 accumulation,
    output keeps x.dtype.
    """
    B, S, D = x.shape
    V = w_t.shape[1]
    assert w_t.shape == (D, V) and b.shape == (V,)
    assert V % 128 == 0, "vocab_size must be a multiple of 128"

    M = B * S
    out_dtype = x.dtype

    # ---- tile-size selection (clamp to the problem, keep HW alignment) ----
    tn = min(tn, V)
    while V % tn:               # terminates at 128 since V % 128 == 0
        tn -= 128
    tm = min(tm, M)
    tm = ((tm + 7) // 8) * 8    # sublane multiple
    Mp = pl.cdiv(M, tm) * tm    # padded M so the grid divides evenly

    # ---- one-time layout / dtype plumbing in plain JAX --------------------
    x2d = x.reshape(M, D).astype(compute_dtype)
    if Mp != M:
        x2d = jnp.pad(x2d, ((0, Mp - M), (0, 0)))
    w2d = w_t.astype(compute_dtype)
    b2d = b.astype(jnp.float32).reshape(1, V)

    # ---- scoped-VMEM budget for the chosen tiles (double-buffered) --------
    c_sz = jnp.dtype(compute_dtype).itemsize
    o_sz = jnp.dtype(out_dtype).itemsize
    est = (2 * tm * D * c_sz        # x tiles
           + 2 * D * tn * c_sz      # weight tiles
           + 2 * tn * 4             # bias tiles
           + 2 * tm * tn * o_sz)    # output tiles
    vmem_limit = int(min(64 * 1024 * 1024, max(32 * 1024 * 1024, est * 1.3)))

    # Vocab OUTER, M inner: weight-tile block index is constant across the
    # inner M loop, so each (D, tn) weight tile is fetched from HBM only once.
    grid = (V // tn, Mp // tm)

    out2d = pl.pallas_call(
        _projection_kernel,
        out_shape=jax.ShapeDtypeStruct((Mp, V), out_dtype),
        grid_spec=pltpu.PrefetchScalarGridSpec(
            num_scalar_prefetch=0,
            grid=grid,
            in_specs=[
                pl.BlockSpec((tm, D), lambda j, i: (i, 0)),   # x tile
                pl.BlockSpec((D, tn), lambda j, i: (0, j)),   # weight tile
                pl.BlockSpec((1, tn), lambda j, i: (0, j)),   # bias tile
            ],
            out_specs=pl.BlockSpec((tm, tn), lambda j, i: (i, j)),
        ),
        compiler_params=pltpu.CompilerParams(
            dimension_semantics=("parallel", "parallel"),
            vmem_limit_bytes=vmem_limit,
        ),
    )(x2d, w2d, b2d)

    if Mp != M:
        out2d = out2d[:M]
    return out2d.reshape(B, S, V)


if __name__ == "__main__":
    # Small shapes consistent with the module's forward.
    batch, seq, d_model, vocab_size = 2, 8, 32, 256

    key = jax.random.PRNGKey(0)
    kx, kw, kb = jax.random.split(key, 3)

    # PyTorch Linear parameter shapes: weight (V, D), bias (V,); we keep the
    # weight pre-transposed as (D, V) for the kernel.
    bound = 1.0 / (d_model ** 0.5)
    weight = jax.random.uniform(kw, (vocab_size, d_model),
                                minval=-bound, maxval=bound, dtype=jnp.float32)
    bias = jax.random.uniform(kb, (vocab_size,),
                              minval=-bound, maxval=bound, dtype=jnp.float32)
    w_t = weight.T  # (d_model, vocab_size)

    x = jax.random.normal(kx, (batch, seq, d_model), dtype=jnp.float32)

    y_ref = x @ w_t + bias  # nn.Linear forward semantics

    # Exact-precision path (f32 streaming) — tight tolerance.
    y_f32 = projection_layer(x, w_t, bias, compute_dtype=jnp.float32)
    y_f32 = jax.block_until_ready(y_f32)
    assert y_f32.shape == (batch, seq, vocab_size)
    assert jnp.allclose(y_f32, y_ref, atol=1e-5, rtol=1e-5)

    # Default fast path (bf16 weight/activation stream, f32 accumulation).
    y = projection_layer(x, w_t, bias)
    y = jax.block_until_ready(y)
    assert y.shape == (batch, seq, vocab_size)
    assert jnp.allclose(y, y_ref, atol=3e-2, rtol=3e-2)

    print("KERNEL_OK")
</pallas_src>

<mosaic_0001>
module attributes {stable_mosaic.version = 11 : i64} {
  func.func @_projection_kernel(%arg0: i32, %arg1: i32, %arg2: memref<16x32xf32, #tpu.memory_space<vmem>>, %arg3: memref<32x256xf32, #tpu.memory_space<vmem>>, %arg4: memref<1x256xf32, #tpu.memory_space<vmem>>, %arg5: memref<16x256xf32, #tpu.memory_space<vmem>>) attributes {dimension_semantics = [#tpu.dimension_semantics<parallel>, #tpu.dimension_semantics<parallel>], iteration_bounds = array<i64: 1, 1>, scalar_prefetch = 0 : i64, scratch_operands = 0 : i64, tpu.core_type = #tpu.core_type<tc>, window_params = [{transform_indices = @transform_0, window_bounds = array<i64: 16, 32>}, {transform_indices = @transform_1, window_bounds = array<i64: 32, 256>}, {transform_indices = @transform_2, window_bounds = array<i64: 1, 256>}, {transform_indices = @transform_3, window_bounds = array<i64: 16, 256>}]} {
    %c0 = arith.constant 0 : index
    %c0_0 = arith.constant 0 : index
    %0 = vector.load %arg2[%c0, %c0_0] : memref<16x32xf32, #tpu.memory_space<vmem>>, vector<16x32xf32>
    %c0_1 = arith.constant 0 : index
    %c0_2 = arith.constant 0 : index
    %1 = vector.load %arg3[%c0_1, %c0_2] : memref<32x256xf32, #tpu.memory_space<vmem>>, vector<32x256xf32>
    %cst = arith.constant dense<0.000000e+00> : vector<16x256xf32>
    %2 = tpu.matmul %0, %1, %cst {dimension_numbers = #tpu.dot_dimension_numbers<[1], [0], [0], [1], [0, 0, 1, 1], [], []>} : vector<16x32xf32>, vector<32x256xf32>, vector<16x256xf32> -> vector<16x256xf32>
    %c0_3 = arith.constant 0 : index
    %c0_4 = arith.constant 0 : index
    %3 = vector.load %arg4[%c0_3, %c0_4] : memref<1x256xf32, #tpu.memory_space<vmem>>, vector<1x256xf32>
    %4 = vector.broadcast %3 : vector<1x256xf32> to vector<16x256xf32>
    %5 = arith.addf %2, %4 : vector<16x256xf32>
    %c0_5 = arith.constant 0 : index
    %c0_6 = arith.constant 0 : index
    %6 = vector.load %arg5[%c0_5, %c0_6] : memref<16x256xf32, #tpu.memory_space<vmem>>, vector<16x256xf32>
    tpu.vector_store %arg5[%c0_5, %c0_6], %5 {strides = array<i32>} : memref<16x256xf32, #tpu.memory_space<vmem>>, vector<16x256xf32>,
    return
  }
  func.func @transform_0(%arg0: i32, %arg1: i32) -> (i32, i32) {
    %c0_i32 = arith.constant 0 : i32
    %c0_i32_0 = arith.constant 0 : i32
    return %arg1, %c0_i32 : i32, i32
  }
  func.func @transform_1(%arg0: i32, %arg1: i32) -> (i32, i32) {
    %c0_i32 = arith.constant 0 : i32
    %c0_i32_0 = arith.constant 0 : i32
    return %c0_i32, %arg0 : i32, i32
  }
  func.func @transform_2(%arg0: i32, %arg1: i32) -> (i32, i32) {
    %c0_i32 = arith.constant 0 : i32
    %c0_i32_0 = arith.constant 0 : i32
    return %c0_i32, %arg0 : i32, i32
  }
  func.func @transform_3(%arg0: i32, %arg1: i32) -> (i32, i32) {
    %c0_i32 = arith.constant 0 : i32
    return %arg1, %arg0 : i32, i32
  }
}

</mosaic_0001>

<llo_original>
// kernel: tpu_custom_call.1
$region0: #{tpu_custom_call.1}
  #allocation0 [shape = 'u32[]', space=smem, size = 0x4, offset = 0x4, fixed_abs, tag = 'smem constant byte address 0x4 - core index']
  #allocation1 [shape = 'u32[144,128]{1,0:T(1,128)}', space=vmem, size = 0x12000, scoped, tag = 'internal scratch']
  %s0 = inlined_call_operand.hbm [shape: f32[16,32], index: 0, kind: input, shape index: {}]
  %s1 = inlined_call_operand.hbm [shape: f32[32,256], index: 1, kind: input, shape index: {}]
  %s2 = inlined_call_operand.vmem [shape: f32[1,256], index: 2, kind: input, shape index: {}]
  %s3 = inlined_call_operand.hbm [shape: f32[16,256], index: 3, kind: output, shape index: {}]
  %s4 = sld [smem:[#allocation0]]
  $region30: #{tpu_custom_call.1} parent=0
    _
  %s6 = ssub.s32 1, %s4
  %s7 = scalar_select 0, %s6, %s4
  $region1: #{tpu_custom_call.1} parent=0
    #allocation2 [shape = 'u8[8192]{0}', space=vmem, size = 0x2000, scoped, tag = 'input window, operand 0, single buffered']
    #allocation3 [shape = 's32[1]{0}', space=sflag, size = 0x4, scoped, tag = 'scoped memory for tpu_custom_call.1']
    #allocation4 [shape = 's32[1]{0}', space=sflag, size = 0x4, scoped, tag = 'scoped memory for tpu_custom_call.1']
    #allocation5 [shape = 'u8[32768]{0}', space=vmem, size = 0x8000, scoped, tag = 'input window, operand 1, single buffered']
    #allocation6 [shape = 's32[1]{0}', space=sflag, size = 0x4, scoped, tag = 'scoped memory for tpu_custom_call.1']
    #allocation7 [shape = 'u8[16384]{0}', space=vmem, size = 0x4000, scoped, tag = 'output window, operand 0, single buffered']
    %8 = vsyncpa [#allocation3], 0
    %9 = vsyncpa [#allocation6], 0
    %10 = vsyncpa [#allocation4], 0
    // Predicated region
    $region2: #{tpu_custom_call.1} parent=1 // pred_check
      _
    $region3: #{tpu_custom_call.1} parent=1 // pred_check_branch
      %12 = sbr.rel (0) target = $region5
    $region4: #{tpu_custom_call.1} parent=1 // pred_region
      %s14 = ssub.s32 256, 256
      %15 = vsyncadd [#allocation3], %s14
      %s16 = sshll.u32 [#allocation2], 4
      %s17 = int_to_ptr.vmem [resolvable:$true] %s16
      %22 = dma.hbm_to_vmem [thread:$0]  %s0, 256, %s17, [#allocation3], 128, 128, 8
    $region5: #{tpu_custom_call.1} parent=1 // pred_fallthru
      _
    // Predicated region
    $region6: #{tpu_custom_call.1} parent=1 // pred_check
      _
    $region7: #{tpu_custom_call.1} parent=1 // pred_check_branch
      %24 = sbr.rel (0) target = $region9
    $region8: #{tpu_custom_call.1} parent=1 // pred_region
      %s26 = ssub.s32 1024, 1024
      %27 = vsyncadd [#allocation6], %s26
      %s28 = sshll.u32 [#allocation5], 4
      %s29 = int_to_ptr.vmem [resolvable:$true] %s28
      %34 = dma.hbm_to_vmem [thread:$0]  %s1, 1024, %s29, [#allocation6], 256, 256, 16
    $region9: #{tpu_custom_call.1} parent=1 // pred_fallthru
      _
    // Predicated region
    $region10: #{tpu_custom_call.1} parent=1 // pred_check
      _
    $region11: #{tpu_custom_call.1} parent=1 // pred_check_branch
      %36 = sbr.rel (0) target = $region13
    $region12: #{tpu_custom_call.1} parent=1 // pred_region
      _
    $region13: #{tpu_custom_call.1} parent=1 // pred_fallthru
      _
    // Predicated region
    $region14: #{tpu_custom_call.1} parent=1 // pred_check
      _
    $region15: #{tpu_custom_call.1} parent=1 // pred_check_branch
      %38 = sbr.rel (0) target = $region17
    $region16: #{tpu_custom_call.1} parent=1 // pred_region
      %39 = dma.done [#allocation3], 256
    $region17: #{tpu_custom_call.1} parent=1 // pred_fallthru
      _
    // Predicated region
    $region18: #{tpu_custom_call.1} parent=1 // pred_check
      _
    $region19: #{tpu_custom_call.1} parent=1 // pred_check_branch
      %41 = sbr.rel (0) target = $region21
    $region20: #{tpu_custom_call.1} parent=1 // pred_region
      %42 = dma.done [#allocation6], 1024
    $region21: #{tpu_custom_call.1} parent=1 // pred_fallthru
      _
    %v43 = vld [vmem:[#allocation2] sm:$0xff]
    %v44 = vld [vmem:[#allocation2 + $0x8] sm:$0xff]
    %v45 = vld [vmem:[#allocation5] sm:$0xff]
    %v46 = vld [vmem:[#allocation5 + $0x8] sm:$0xff]
    %v47 = vld [vmem:[#allocation5 + $0x10] sm:$0xff]
    %v48 = vld [vmem:[#allocation5 + $0x18] sm:$0xff]
    %v49 = vld [vmem:[#allocation5 + $0x20] sm:$0xff]
    %v50 = vld [vmem:[#allocation5 + $0x28] sm:$0xff]
    %v51 = vld [vmem:[#allocation5 + $0x30] sm:$0xff]
    %v52 = vld [vmem:[#allocation5 + $0x38] sm:$0xff]
    %v53 = vld [vmem:[%s2] sm:$0x3]
    %v55 = vlaneseq
    %v56 = vshrl.u32 %v55, 7
    %v57 = vsub.s32 0, %v56
    %v58 = vrot.slane %v53, %v57
    %v59 = vlaneseq
    %v60 = vshrl.u32 %v59, 7
    %v61 = vsub.s32 1, %v60
    %v62 = vrot.slane %v53, %v61
    %vm65 = vcmask 261120
    %v67 = vsel %vm65, %v43, 0
    %v70 = vsel %vm65, %v44, 0
    %72 = vmatprep.subr.mxu0 %v46
    %73 = vmatpush1.msra.mxu0 %v45
    %74 = vmatprep.subr.mxu0 %v48
    %75 = vmatpush1.msra.mxu0 %v47
    %76 = vmatprep.subr.mxu0 %v50
    %77 = vmatpush1.msra.mxu0 %v49
    %78 = vmatprep.subr.mxu0 %v52
    %79 = vmatpush1.msra.mxu0 %v51
    %80 = vmatprep.subr.mxu0 0.0
    %81 = vmatpush1.msra.mxu0 0.0
    %82 = vmatprep.subr.mxu0 0.0
    %83 = vmatpush1.msra.mxu0 0.0
    %84 = vmatprep.subr.mxu0 0.0
    %85 = vmatpush1.msra.mxu0 0.0
    %86 = vmatprep.subr.mxu0 0.0
    %87 = vmatpush1.msra.mxu0 0.0
    %88 = vmatprep.subr.mxu0 0.0
    %89 = vmatpush1.msra.mxu0 0.0
    %90 = vmatprep.subr.mxu0 0.0
    %91 = vmatpush1.msra.mxu0 0.0
    %92 = vmatprep.subr.mxu0 0.0
    %93 = vmatpush1.msra.mxu0 0.0
    %94 = vmatprep.subr.mxu0 0.0
    %95 = vmatpush1.msra.mxu0 0.0
    %96 = vmatprep.subr.mxu0 0.0
    %97 = vmatpush1.msra.mxu0 0.0
    %98 = vmatprep.subr.mxu0 0.0
    %99 = vmatpush1.msra.mxu0 0.0
    %100 = vmatprep.subr.mxu0 0.0
    %101 = vmatpush1.msra.mxu0 0.0
    %102 = vmatprep.subr.mxu0 0.0
    %103 = vmatpush1.msra.mxu0 0.0
    %104 = vmatprep.subr.mxu0 0.0
    %105 = vmatpush1.msra.mxu0 0.0
    %106 = vmatprep.subr.mxu0 0.0
    %107 = vmatpush1.msra.mxu0 0.0
    %108 = vmatprep.subr.mxu0 0.0
    %109 = vmatpush1.msra.mxu0 0.0
    %110 = vmatprep.subr.mxu0 0.0
    %111 = vmatpush1.msra.mxu0 0.0
    %112 = vmatprep.subr.mxu0 0.0
    %113 = vmatpush1.msra.mxu0 0.0
    %114 = vmatprep.subr.mxu0 0.0
    %115 = vmatpush1.msra.mxu0 0.0
    %116 = vmatprep.subr.mxu0 0.0
    %117 = vmatpush1.msra.mxu0 0.0
    %118 = vmatprep.subr.mxu0 0.0
    %119 = vmatpush1.msra.mxu0 0.0
    %120 = vmatprep.subr.mxu0 0.0
    %121 = vmatpush1.msra.mxu0 0.0
    %122 = vmatprep.subr.mxu0 0.0
    %123 = vmatpush1.msra.mxu0 0.0
    %124 = vmatprep.subr.mxu0 0.0
    %125 = vmatpush1.msra.mxu0 0.0
    %126 = vmatprep.subr.mxu0 0.0
    %127 = vmatpush1.msra.mxu0 0.0
    %128 = vmatprep.subr.mxu0 0.0
    %129 = vmatpush1.msra.mxu0 0.0
    %130 = vmatprep.subr.mxu0 0.0
    %131 = vmatpush1.msra.mxu0 0.0
    %132 = vmatprep.subr.mxu0 0.0
    %133 = vmatpush1.msra.mxu0 0.0
    %134 = vmatprep.subr.mxu0 0.0
    %135 = vmatpush1.msra.mxu0 0.0
    %136 = vmatprep.mubr.f32.mxu0 0.0
    %137 = vmatmul.mubr.f32.gmra.mrb[0].mxu0 %v67
    %v138 = vpop.f32.mrb[0].mxu0
    %v139 = vadd.f32 %v58, %v138
    %v140 = vpop.f32.mrb[0].mxu0
    %v141 = vadd.f32 %v62, %v140
    %142 = vmatprep.mubr.f32.mxu0 0.0
    %143 = vmatmul.mubr.f32.gmra.mrb[0].mxu0 %v70
    %v144 = vpop.f32.mrb[0].mxu0
    %v145 = vadd.f32 %v58, %v144
    %v146 = vpop.f32.mrb[0].mxu0
    %v147 = vadd.f32 %v62, %v146
    %148 = vdwg.mxu0
    %149 = vst [vmem:[#allocation7] sm:$0xff] %v139
    %150 = vst [vmem:[#allocation7 + $0x8] sm:$0xff] %v141
    %151 = vst [vmem:[#allocation7 + $0x10] sm:$0xff] %v145
    %152 = vst [vmem:[#allocation7 + $0x18] sm:$0xff] %v147
    // Predicated region
    $region22: #{tpu_custom_call.1} parent=1 // pred_check
      _
    $region23: #{tpu_custom_call.1} parent=1 // pred_check_branch
      %154 = sbr.rel (0) target = $region25
    $region24: #{tpu_custom_call.1} parent=1 // pred_region
      %s156 = ssub.s32 512, 512
      %157 = vsyncadd [#allocation4], %s156
      %s158 = sshll.u32 [#allocation7], 4
      %s159 = int_to_ptr.vmem [resolvable:$true] %s158
      %164 = dma.vmem_to_hbm [thread:$0]  %s159, 512, %s3, [#allocation4], 256, 256, 16
    $region25: #{tpu_custom_call.1} parent=1 // pred_fallthru
      _
    // Predicated region
    $region26: #{tpu_custom_call.1} parent=1 // pred_check
      _
    $region27: #{tpu_custom_call.1} parent=1 // pred_check_branch
      %166 = sbr.rel (0) target = $region29
    $region28: #{tpu_custom_call.1} parent=1 // pred_region
      %167 = dma.done [#allocation4], 512
    $region29: #{tpu_custom_call.1} parent=1 // pred_fallthru
      _
    %168 = vsyncpa [#allocation3], 1
    %169 = vsyncpa [#allocation6], 1
    %170 = vsyncpa [#allocation4], 1

</llo_original>
